<compile_context>
chip_gen: v7x
topology: tpu7x:2x2x1
jax: 0.10.0
libtpu: 0.0.40
codegen_flags: <defaults>
</compile_context>

<pallas_src>
import functools
import math

import jax
import jax.numpy as jnp
from jax import lax
from jax.experimental import pallas as pl
from jax.experimental.pallas import tpu as pltpu


# ------------------------------ helpers -------------------------------------

def _vmem_limit_bytes():
    """~3/4 of physical VMEM (96 MiB on v5e/v6e, 48 MiB on v7x)."""
    try:
        return int(pltpu.get_tpu_info().vmem_capacity_bytes * 3 // 4)
    except Exception:
        return 32 * 1024 * 1024


_VMEM_LIMIT = _vmem_limit_bytes()


def _pick_tile(n, target, align=8):
    """Largest divisor of n that is <= target and a multiple of `align`,
    falling back to the full extent."""
    t = min(n, target)
    for cand in range(t, 0, -1):
        if n % cand == 0 and (cand % align == 0 or cand == n):
            return cand
    return n


# ----------------------------- Pallas kernels -------------------------------

def linear_kernel(x_ref, w_ref, b_ref, o_ref, acc_ref):
    # o = x @ w + b with the Din reduction tiled on grid axis 1 (f32 accumulator).
    # Weights are pre-cast to bf16 outside the kernel (no per-step cast).
    kk = pl.program_id(1)

    @pl.when(kk == 0)
    def _():
        acc_ref[...] = jnp.zeros_like(acc_ref)

    acc_ref[...] += jnp.dot(x_ref[...].astype(jnp.bfloat16), w_ref[...],
                            preferred_element_type=jnp.float32)

    @pl.when(kk == pl.num_programs(1) - 1)
    def _():
        o_ref[...] = (acc_ref[...] + b_ref[...].astype(jnp.float32)).astype(o_ref.dtype)


def qkv_linear_kernel(x_ref, w_ref, b_ref, q_ref, k_ref, v_ref, acc_ref):
    # Fused Q/K/V projection: one x read, one (tk, 3*Dout) bf16 weight block,
    # three lane-dense outputs.  1/sqrt(d_k) is already folded into the Q slice.
    kk = pl.program_id(1)

    @pl.when(kk == 0)
    def _():
        acc_ref[...] = jnp.zeros_like(acc_ref)

    acc_ref[...] += jnp.dot(x_ref[...].astype(jnp.bfloat16), w_ref[...],
                            preferred_element_type=jnp.float32)

    @pl.when(kk == pl.num_programs(1) - 1)
    def _():
        d = q_ref.shape[-1]
        y = acc_ref[...] + b_ref[...].astype(jnp.float32)
        q_ref[...] = y[:, :d].astype(q_ref.dtype)
        k_ref[...] = y[:, d:2 * d].astype(k_ref.dtype)
        v_ref[...] = y[:, 2 * d:].astype(v_ref.dtype)


def attn_headloop_kernel(q_ref, k_ref, v_ref, o_ref, *, h, d_k, group):
    # One (batch, query-tile); all heads processed with full KV resident.
    # Heads handled `group` at a time; each group's context is stored directly
    # into its lane slice of the output (no all-head concat -> bounded live ranges).
    q = q_ref[0]            # (tq, h*d_k) bf16; 1/sqrt(d_k) folded into wq
    k = k_ref[0]            # (Sk, h*d_k) bf16
    v = v_ref[0]
    for g in range(h // group):
        parts = []
        for j in range(group):
            lo = (g * group + j) * d_k
            qh = q[:, lo:lo + d_k]
            kh = k[:, lo:lo + d_k]
            vh = v[:, lo:lo + d_k]
            # Contract last dims -> K consumed untransposed (no XLU pass).
            s = lax.dot_general(qh, kh, (((1,), (1,)), ((), ())),
                                preferred_element_type=jnp.float32)      # (tq, Sk)
            s = s - jnp.max(s, axis=-1, keepdims=True)                   # stable softmax (f32)
            e = jnp.exp(s)
            p = e * pl.reciprocal(jnp.sum(e, axis=-1, keepdims=True), approx=True)
            parts.append(jnp.dot(p.astype(vh.dtype), vh,
                                 preferred_element_type=jnp.float32))    # (tq, d_k)
        blk = parts[0] if group == 1 else jnp.concatenate(parts, axis=-1)
        glo = g * group * d_k
        o_ref[0, :, glo:glo + group * d_k] = blk.astype(o_ref.dtype)


def flash_attn_kernel(q_ref, k_ref, v_ref, o_ref, m_sc, l_sc, acc_sc):
    # One (batch, head, query-tile); KV streamed on the innermost ("arbitrary")
    # grid axis with an online softmax (m/l/acc in VMEM scratch).
    kv = pl.program_id(3)

    @pl.when(kv == 0)
    def _():
        m_sc[...] = jnp.full_like(m_sc, -jnp.inf)
        l_sc[...] = jnp.zeros_like(l_sc)
        acc_sc[...] = jnp.zeros_like(acc_sc)

    q = q_ref[0]            # (tq, d_k)  bf16, pre-scaled
    k = k_ref[0]            # (tkv, d_k) bf16
    v = v_ref[0]            # (tkv, d_k) bf16
    s = lax.dot_general(q, k, (((1,), (1,)), ((), ())),
                        preferred_element_type=jnp.float32)              # (tq, tkv)
    m_new = jnp.maximum(m_sc[...], jnp.max(s, axis=-1, keepdims=True))
    alpha = jnp.exp(m_sc[...] - m_new)
    p = jnp.exp(s - m_new)
    l_sc[...] = alpha * l_sc[...] + jnp.sum(p, axis=-1, keepdims=True)
    acc_sc[...] = alpha * acc_sc[...] + jnp.dot(p.astype(v.dtype), v,
                                                preferred_element_type=jnp.float32)
    m_sc[...] = m_new

    @pl.when(kv == pl.num_programs(3) - 1)
    def _():
        o_ref[0] = (acc_sc[...] * pl.reciprocal(l_sc[...], approx=True)).astype(o_ref.dtype)


# ------------------------------ wrappers -------------------------------------

def pallas_linear(x, w, b, out_dtype=jnp.float32, tm_target=512, tk_target=512):
    """x: (M, Din) @ w: (Din, Dout) [bf16, pre-cast] + b -> (M, Dout)."""
    M, Din = x.shape
    Dout = w.shape[1]
    tm = _pick_tile(M, tm_target, align=16 if out_dtype == jnp.bfloat16 else 8)
    tk = _pick_tile(Din, tk_target, align=128)
    return pl.pallas_call(
        linear_kernel,
        grid=(M // tm, Din // tk),
        out_shape=jax.ShapeDtypeStruct((M, Dout), out_dtype),
        in_specs=[
            pl.BlockSpec((tm, tk), lambda i, kk: (i, kk)),
            pl.BlockSpec((tk, Dout), lambda i, kk: (kk, 0)),
            pl.BlockSpec((1, Dout), lambda i, kk: (0, 0)),
        ],
        out_specs=pl.BlockSpec((tm, Dout), lambda i, kk: (i, 0)),
        scratch_shapes=[pltpu.VMEM((tm, Dout), jnp.float32)],
        compiler_params=pltpu.CompilerParams(
            dimension_semantics=("parallel", "arbitrary"),
            vmem_limit_bytes=_VMEM_LIMIT),
    )(x, w, b.reshape(1, Dout))


def pallas_qkv_linear(x, w_qkv, b_qkv, out_dtype=jnp.bfloat16,
                      tm_target=512, tk_target=512):
    """Fused QKV projection. x: (M, Din), w_qkv: (Din, 3*Dout) bf16 -> 3 x (M, Dout)."""
    M, Din = x.shape
    Dout3 = w_qkv.shape[1]
    Dout = Dout3 // 3
    tm = _pick_tile(M, tm_target, align=16 if out_dtype == jnp.bfloat16 else 8)
    tk = _pick_tile(Din, tk_target, align=128)
    return pl.pallas_call(
        qkv_linear_kernel,
        grid=(M // tm, Din // tk),
        out_shape=tuple(jax.ShapeDtypeStruct((M, Dout), out_dtype) for _ in range(3)),
        in_specs=[
            pl.BlockSpec((tm, tk), lambda i, kk: (i, kk)),
            pl.BlockSpec((tk, Dout3), lambda i, kk: (kk, 0)),
            pl.BlockSpec((1, Dout3), lambda i, kk: (0, 0)),
        ],
        out_specs=tuple(pl.BlockSpec((tm, Dout), lambda i, kk: (i, 0)) for _ in range(3)),
        scratch_shapes=[pltpu.VMEM((tm, Dout3), jnp.float32)],
        compiler_params=pltpu.CompilerParams(
            dimension_semantics=("parallel", "arbitrary"),
            vmem_limit_bytes=_VMEM_LIMIT),
    )(x, w_qkv, b_qkv.reshape(1, Dout3))


def _attention_headloop(q, k, v, *, h, d_k, tq_target):
    B, Sq, d_model = q.shape
    Sk = k.shape[1]
    tq = _pick_tile(Sq, tq_target, align=16 if q.dtype == jnp.bfloat16 else 8)
    # Group heads so each output store is >= 128 lanes wide when possible.
    group = h
    for cand in range(1, h + 1):
        if h % cand == 0 and cand * d_k >= 128:
            group = cand
            break
    kernel = functools.partial(attn_headloop_kernel, h=h, d_k=d_k, group=group)
    return pl.pallas_call(
        kernel,
        grid=(B, Sq // tq),
        out_shape=jax.ShapeDtypeStruct((B, Sq, d_model), q.dtype),
        in_specs=[
            pl.BlockSpec((1, tq, d_model), lambda b, i: (b, i, 0)),
            pl.BlockSpec((1, Sk, d_model), lambda b, i: (b, 0, 0)),
            pl.BlockSpec((1, Sk, d_model), lambda b, i: (b, 0, 0)),
        ],
        out_specs=pl.BlockSpec((1, tq, d_model), lambda b, i: (b, i, 0)),
        compiler_params=pltpu.CompilerParams(
            dimension_semantics=("parallel", "parallel"),
            vmem_limit_bytes=_VMEM_LIMIT),
    )(q, k, v)


def _attention_flash(q, k, v, *, h, d_k, tq_target, tkv_target):
    B, Sq, d_model = q.shape
    Sk = k.shape[1]
    align = 16 if q.dtype == jnp.bfloat16 else 8
    tq = _pick_tile(Sq, tq_target, align=align)
    tkv = _pick_tile(Sk, tkv_target, align=align)
    return pl.pallas_call(
        flash_attn_kernel,
        grid=(B, h, Sq // tq, Sk // tkv),
        out_shape=jax.ShapeDtypeStruct((B, Sq, d_model), q.dtype),
        in_specs=[
            pl.BlockSpec((1, tq, d_k), lambda b, hd, qi, kv: (b, qi, hd)),
            pl.BlockSpec((1, tkv, d_k), lambda b, hd, qi, kv: (b, kv, hd)),
            pl.BlockSpec((1, tkv, d_k), lambda b, hd, qi, kv: (b, kv, hd)),
        ],
        out_specs=pl.BlockSpec((1, tq, d_k), lambda b, hd, qi, kv: (b, qi, hd)),
        scratch_shapes=[
            pltpu.VMEM((tq, 1), jnp.float32),     # running max m
            pltpu.VMEM((tq, 1), jnp.float32),     # running denom l
            pltpu.VMEM((tq, d_k), jnp.float32),   # running context acc
        ],
        compiler_params=pltpu.CompilerParams(
            dimension_semantics=("parallel", "parallel", "parallel", "arbitrary"),
            vmem_limit_bytes=_VMEM_LIMIT),
    )(q, k, v)


def pallas_attention(q, k, v, *, h, tq_target=256, tkv_target=512):
    """q: (B,Sq,h*d_k), k/v: (B,Sk,h*d_k) -> context (B,Sq,h*d_k). No probs writeback."""
    d_model = q.shape[-1]
    d_k = d_model // h
    if d_k % 128 == 0:
        return _attention_flash(q, k, v, h=h, d_k=d_k,
                                tq_target=tq_target, tkv_target=tkv_target)
    return _attention_headloop(q, k, v, h=h, d_k=d_k, tq_target=tq_target)


# --------------------------- parameter prep / forward ------------------------

def prepare_params(raw):
    """One-time prep: bf16 weights, pre-concatenated QKV weight/bias, and
    1/sqrt(d_k) folded into the Q projection.  Weights are stored as
    (Din, Dout) = W.T of the PyTorch nn.Linear."""
    h = raw["h"]
    d_model = raw["wq"].shape[0]
    d_k = d_model // h
    scale = 1.0 / math.sqrt(d_k)
    wq = (raw["wq"] * scale).astype(jnp.bfloat16)
    bq = (raw["bq"] * scale).astype(jnp.float32)
    wk = raw["wk"].astype(jnp.bfloat16)
    wv = raw["wv"].astype(jnp.bfloat16)
    return {
        "h": h,
        "d_k": d_k,
        "wq": wq, "bq": bq,
        "wk": wk, "bk": raw["bk"].astype(jnp.float32),
        "wv": wv, "bv": raw["bv"].astype(jnp.float32),
        "w_qkv": jnp.concatenate([wq, wk, wv], axis=1),
        "b_qkv": jnp.concatenate([bq, raw["bk"], raw["bv"]]).astype(jnp.float32),
        "wo": raw["wo"].astype(jnp.bfloat16),
        "bo": raw["bo"].astype(jnp.float32),
    }


def multi_head_attention(prep, query, key, value):
    """Pallas implementation of MultiHeadAttention.forward (mask=None, eval mode)."""
    B, Sq, d_model = query.shape
    Sk = key.shape[1]
    h = prep["h"]
    act_dtype = jnp.bfloat16   # intermediate activations (halves inter-kernel HBM traffic)

    if (query is key) and (key is value):
        # Self-attention: fused QKV projection (x and weights read once).
        q2d, k2d, v2d = pallas_qkv_linear(
            query.reshape(B * Sq, d_model), prep["w_qkv"], prep["b_qkv"],
            out_dtype=act_dtype)
    else:
        q2d = pallas_linear(query.reshape(B * Sq, d_model), prep["wq"], prep["bq"],
                            out_dtype=act_dtype)
        k2d = pallas_linear(key.reshape(B * Sk, d_model), prep["wk"], prep["bk"],
                            out_dtype=act_dtype)
        v2d = pallas_linear(value.reshape(B * Sk, d_model), prep["wv"], prep["bv"],
                            out_dtype=act_dtype)

    # Keep (B, S, h*d_k) layout throughout -- no host transposes.
    q = q2d.reshape(B, Sq, d_model)
    k = k2d.reshape(B, Sk, d_model)
    v = v2d.reshape(B, Sk, d_model)

    ctx = pallas_attention(q, k, v, h=h)                      # (B, Sq, d_model)

    out = pallas_linear(ctx.reshape(B * Sq, d_model), prep["wo"], prep["bo"],
                        out_dtype=jnp.float32)
    return out.reshape(B, Sq, d_model)


# ------------------------------ reference -----------------------------------

def reference_mha(raw, query, key, value):
    B, Sq, d_model = query.shape
    Sk = key.shape[1]
    h = raw["h"]
    d_k = d_model // h

    def proj(x, w, b):
        B_, S_, _ = x.shape
        y = x.reshape(B_ * S_, d_model) @ w + b
        return y.reshape(B_, S_, h, d_k).transpose(0, 2, 1, 3)

    q = proj(query, raw["wq"], raw["bq"])
    k = proj(key, raw["wk"], raw["bk"])
    v = proj(value, raw["wv"], raw["bv"])

    scores = jnp.einsum("bhqd,bhkd->bhqk", q, k) / math.sqrt(d_k)
    p = jax.nn.softmax(scores, axis=-1)
    x = jnp.einsum("bhqk,bhkd->bhqd", p, v)
    x = x.transpose(0, 2, 1, 3).reshape(B * Sq, d_model)
    return (x @ raw["wo"] + raw["bo"]).reshape(B, Sq, d_model)


# --------------------------------- main --------------------------------------

if __name__ == "__main__":
    def make_params(key, d_model, h):
        ks = jax.random.split(key, 8)

        def w(kk):
            return (0.02 * jax.random.normal(kk, (d_model, d_model))).astype(jnp.float32)

        def b(kk):
            return (0.01 * jax.random.normal(kk, (d_model,))).astype(jnp.float32)

        return {"h": h,
                "wq": w(ks[0]), "bq": b(ks[1]),
                "wk": w(ks[2]), "bk": b(ks[3]),
                "wv": w(ks[4]), "bv": b(ks[5]),
                "wo": w(ks[6]), "bo": b(ks[7])}

    root = jax.random.PRNGKey(0)
    kp1, kp2, kx1, kq, kk_, kv_, kx2 = jax.random.split(root, 7)

    # --- Case 1: d_k < 128 (in-kernel head loop), self- and cross-attention ---
    B, S, d_model, h = 2, 8, 32, 4
    raw1 = make_params(kp1, d_model, h)
    prep1 = prepare_params(raw1)

    x_self = jax.random.normal(kx1, (B, S, d_model), dtype=jnp.float32)
    out_self = jax.block_until_ready(multi_head_attention(prep1, x_self, x_self, x_self))
    ref_self = reference_mha(raw1, x_self, x_self, x_self)
    assert out_self.shape == (B, S, d_model)
    assert jnp.allclose(out_self, ref_self, atol=2e-2, rtol=2e-2), "self-attn mismatch"

    query = jax.random.normal(kq, (B, S, d_model), dtype=jnp.float32)
    key_t = jax.random.normal(kk_, (B, S, d_model), dtype=jnp.float32)
    value = jax.random.normal(kv_, (B, S, d_model), dtype=jnp.float32)
    out_cross = jax.block_until_ready(multi_head_attention(prep1, query, key_t, value))
    ref_cross = reference_mha(raw1, query, key_t, value)
    assert out_cross.shape == (B, S, d_model)
    assert jnp.allclose(out_cross, ref_cross, atol=2e-2, rtol=2e-2), "cross-attn mismatch"

    # --- Case 2: d_k == 128 (head-grid flash attention with KV tiling) ---
    B2, S2, d_model2, h2 = 2, 16, 256, 2
    raw2 = make_params(kp2, d_model2, h2)
    prep2 = prepare_params(raw2)
    x2 = jax.random.normal(kx2, (B2, S2, d_model2), dtype=jnp.float32)
    out2 = jax.block_until_ready(multi_head_attention(prep2, x2, x2, x2))
    ref2 = reference_mha(raw2, x2, x2, x2)
    assert out2.shape == (B2, S2, d_model2)
    assert jnp.allclose(out2, ref2, atol=2e-2, rtol=2e-2), "flash-attn mismatch"

    print("KERNEL_OK")
</pallas_src>

<mosaic_0001>
module attributes {stable_mosaic.version = 11 : i64} {
  func.func @qkv_linear_kernel(%arg0: i32, %arg1: i32, %arg2: memref<16x32xf32, #tpu.memory_space<vmem>>, %arg3: memref<32x96xbf16, #tpu.memory_space<vmem>>, %arg4: memref<1x96xf32, #tpu.memory_space<vmem>>, %arg5: memref<16x32xbf16, #tpu.memory_space<vmem>>, %arg6: memref<16x32xbf16, #tpu.memory_space<vmem>>, %arg7: memref<16x32xbf16, #tpu.memory_space<vmem>>, %arg8: memref<16x96xf32, #tpu.memory_space<vmem>>) attributes {dimension_semantics = [#tpu.dimension_semantics<parallel>, #tpu.dimension_semantics<arbitrary>], iteration_bounds = array<i64: 1, 1>, scalar_prefetch = 0 : i64, scratch_operands = 1 : i64, tpu.core_type = #tpu.core_type<tc>, window_params = [{transform_indices = @transform_0, window_bounds = array<i64: 16, 32>}, {transform_indices = @transform_1, window_bounds = array<i64: 32, 96>}, {pipeline_mode = #tpu.pipeline_mode<synchronous>, transform_indices = @transform_2, window_bounds = array<i64: 1, 96>}, {transform_indices = @transform_3, window_bounds = array<i64: 16, 32>}, {transform_indices = @transform_4, window_bounds = array<i64: 16, 32>}, {transform_indices = @transform_5, window_bounds = array<i64: 16, 32>}]} {
    %c0_i32 = arith.constant 0 : i32
    %0 = arith.cmpi eq, %arg1, %c0_i32 : i32
    %1 = arith.extui %0 : i1 to i32
    %c0_i32_0 = arith.constant 0 : i32
    %2 = arith.cmpi ne, %1, %c0_i32_0 : i32
    scf.if %2 {
      %cst_10 = arith.constant 0.000000e+00 : f32
      %13 = vector.broadcast %cst_10 : f32 to vector<16x96xf32>
      %c0_11 = arith.constant 0 : index
      %c0_12 = arith.constant 0 : index
      %14 = vector.load %arg8[%c0_11, %c0_12] : memref<16x96xf32, #tpu.memory_space<vmem>>, vector<16x96xf32>
      tpu.vector_store %arg8[%c0_11, %c0_12], %13 {strides = array<i32>} : memref<16x96xf32, #tpu.memory_space<vmem>>, vector<16x96xf32>,
    } else {
    }
    %c0 = arith.constant 0 : index
    %c0_1 = arith.constant 0 : index
    %3 = vector.load %arg8[%c0, %c0_1] : memref<16x96xf32, #tpu.memory_space<vmem>>, vector<16x96xf32>
    %c0_2 = arith.constant 0 : index
    %c0_3 = arith.constant 0 : index
    %4 = vector.load %arg2[%c0_2, %c0_3] : memref<16x32xf32, #tpu.memory_space<vmem>>, vector<16x32xf32>
    %5 = arith.truncf %4 : vector<16x32xf32> to vector<16x32xbf16>
    %c0_4 = arith.constant 0 : index
    %c0_5 = arith.constant 0 : index
    %6 = vector.load %arg3[%c0_4, %c0_5] : memref<32x96xbf16, #tpu.memory_space<vmem>>, vector<32x96xbf16>
    %cst = arith.constant dense<0.000000e+00> : vector<16x96xf32>
    %7 = tpu.matmul %5, %6, %cst {dimension_numbers = #tpu.dot_dimension_numbers<[1], [0], [0], [1], [0, 0, 1, 1], [], []>} : vector<16x32xbf16>, vector<32x96xbf16>, vector<16x96xf32> -> vector<16x96xf32>
    %8 = arith.addf %3, %7 : vector<16x96xf32>
    %c0_6 = arith.constant 0 : index
    %c0_7 = arith.constant 0 : index
    %9 = vector.load %arg8[%c0_6, %c0_7] : memref<16x96xf32, #tpu.memory_space<vmem>>, vector<16x96xf32>
    tpu.vector_store %arg8[%c0_6, %c0_7], %8 {strides = array<i32>} : memref<16x96xf32, #tpu.memory_space<vmem>>, vector<16x96xf32>,
    %c0_i32_8 = arith.constant 0 : i32
    %10 = arith.cmpi eq, %arg1, %c0_i32_8 : i32
    %11 = arith.extui %10 : i1 to i32
    %c0_i32_9 = arith.constant 0 : i32
    %12 = arith.cmpi ne, %11, %c0_i32_9 : i32
    scf.if %12 {
      %c0_10 = arith.constant 0 : index
      %c0_11 = arith.constant 0 : index
      %13 = vector.load %arg8[%c0_10, %c0_11] : memref<16x96xf32, #tpu.memory_space<vmem>>, vector<16x96xf32>
      %c0_12 = arith.constant 0 : index
      %c0_13 = arith.constant 0 : index
      %14 = vector.load %arg4[%c0_12, %c0_13] : memref<1x96xf32, #tpu.memory_space<vmem>>, vector<1x96xf32>
      %15 = vector.broadcast %14 : vector<1x96xf32> to vector<16x96xf32>
      %16 = arith.addf %13, %15 : vector<16x96xf32>
      %17 = vector.extract_strided_slice %16 {offsets = [0, 0], sizes = [16, 32], strides = [1, 1]} : vector<16x96xf32> to vector<16x32xf32>
      %18 = arith.truncf %17 : vector<16x32xf32> to vector<16x32xbf16>
      %c0_14 = arith.constant 0 : index
      %c0_15 = arith.constant 0 : index
      %19 = vector.load %arg5[%c0_14, %c0_15] : memref<16x32xbf16, #tpu.memory_space<vmem>>, vector<16x32xbf16>
      tpu.vector_store %arg5[%c0_14, %c0_15], %18 {strides = array<i32>} : memref<16x32xbf16, #tpu.memory_space<vmem>>, vector<16x32xbf16>,
      %20 = vector.extract_strided_slice %16 {offsets = [0, 32], sizes = [16, 32], strides = [1, 1]} : vector<16x96xf32> to vector<16x32xf32>
      %21 = arith.truncf %20 : vector<16x32xf32> to vector<16x32xbf16>
      %c0_16 = arith.constant 0 : index
      %c0_17 = arith.constant 0 : index
      %22 = vector.load %arg6[%c0_16, %c0_17] : memref<16x32xbf16, #tpu.memory_space<vmem>>, vector<16x32xbf16>
      tpu.vector_store %arg6[%c0_16, %c0_17], %21 {strides = array<i32>} : memref<16x32xbf16, #tpu.memory_space<vmem>>, vector<16x32xbf16>,
      %23 = vector.extract_strided_slice %16 {offsets = [0, 64], sizes = [16, 32], strides = [1, 1]} : vector<16x96xf32> to vector<16x32xf32>
      %24 = arith.truncf %23 : vector<16x32xf32> to vector<16x32xbf16>
      %c0_18 = arith.constant 0 : index
      %c0_19 = arith.constant 0 : index
      %25 = vector.load %arg7[%c0_18, %c0_19] : memref<16x32xbf16, #tpu.memory_space<vmem>>, vector<16x32xbf16>
      tpu.vector_store %arg7[%c0_18, %c0_19], %24 {strides = array<i32>} : memref<16x32xbf16, #tpu.memory_space<vmem>>, vector<16x32xbf16>,
    } else {
    }
    return
  }
  func.func @transform_0(%arg0: i32, %arg1: i32) -> (i32, i32) {
    %c0_i32 = arith.constant 0 : i32
    return %arg0, %arg1 : i32, i32
  }
  func.func @transform_1(%arg0: i32, %arg1: i32) -> (i32, i32) {
    %c0_i32 = arith.constant 0 : i32
    %c0_i32_0 = arith.constant 0 : i32
    return %arg1, %c0_i32 : i32, i32
  }
  func.func @transform_2(%arg0: i32, %arg1: i32) -> (i32, i32) {
    %c0_i32 = arith.constant 0 : i32
    %c0_i32_0 = arith.constant 0 : i32
    %c0_i32_1 = arith.constant 0 : i32
    return %c0_i32, %c0_i32_0 : i32, i32
  }
  func.func @transform_3(%arg0: i32, %arg1: i32) -> (i32, i32) {
    %c0_i32 = arith.constant 0 : i32
    %c0_i32_0 = arith.constant 0 : i32
    return %arg0, %c0_i32 : i32, i32
  }
  func.func @transform_4(%arg0: i32, %arg1: i32) -> (i32, i32) {
    %c0_i32 = arith.constant 0 : i32
    %c0_i32_0 = arith.constant 0 : i32
    return %arg0, %c0_i32 : i32, i32
  }
  func.func @transform_5(%arg0: i32, %arg1: i32) -> (i32, i32) {
    %c0_i32 = arith.constant 0 : i32
    %c0_i32_0 = arith.constant 0 : i32
    return %arg0, %c0_i32 : i32, i32
  }
}

</mosaic_0001>

<llo_original>
// kernel: tpu_custom_call.1
$region0: #{tpu_custom_call.1}
  #allocation0 [shape = 'u32[]', space=smem, size = 0x4, offset = 0x4, fixed_abs, tag = 'smem constant byte address 0x4 - core index']
  #allocation1 [shape = 'u32[144,128]{1,0:T(1,128)}', space=vmem, size = 0x12000, scoped, tag = 'internal scratch']
  #allocation2 [shape = 'f32[16,96]{1,0:T(8,128)}', space=vmem, size = 0x2000, scoped, tag = 'scratch operand']
  %s0 = inlined_call_operand.hbm [shape: f32[16,32], index: 0, kind: input, shape index: {}]
  %s1 = inlined_call_operand.hbm [shape: bf16[32,96], index: 1, kind: input, shape index: {}]
  %s2 = inlined_call_operand.vmem [shape: f32[1,96], index: 2, kind: input, shape index: {}]
  %s3 = inlined_call_operand.hbm [shape: bf16[16,32], index: 3, kind: output, shape index: {0}]
  %s4 = inlined_call_operand.hbm [shape: bf16[16,32], index: 4, kind: output, shape index: {1}]
  %s5 = inlined_call_operand.hbm [shape: bf16[16,32], index: 5, kind: output, shape index: {2}]
  %6 = xla_tuple %s3, %s4, %s5
  %s7 = sld [smem:[#allocation0]]
  $region54: #{tpu_custom_call.1} parent=0
    _
  %s9 = ssub.s32 1, %s7
  %s10 = scalar_select 0, %s9, %s7
  $region1: #{tpu_custom_call.1} parent=0
    #allocation3 [shape = 'u8[8192]{0}', space=vmem, size = 0x2000, scoped, tag = 'input window, operand 0, single buffered']
    #allocation4 [shape = 's32[1]{0}', space=sflag, size = 0x4, scoped, tag = 'scoped memory for tpu_custom_call.1']
    #allocation5 [shape = 's32[1]{0}', space=sflag, size = 0x4, scoped, tag = 'scoped memory for tpu_custom_call.1']
    #allocation6 [shape = 'u8[8192]{0}', space=vmem, size = 0x2000, scoped, tag = 'input window, operand 1, single buffered']
    #allocation7 [shape = 's32[1]{0}', space=sflag, size = 0x4, scoped, tag = 'scoped memory for tpu_custom_call.1']
    #allocation8 [shape = 'u8[4096]{0}', space=vmem, size = 0x1000, scoped, tag = 'output window, operand 0, single buffered']
    #allocation9 [shape = 'u8[4096]{0}', space=vmem, size = 0x1000, scoped, tag = 'output window, operand 1, single buffered']
    #allocation10 [shape = 's32[1]{0}', space=sflag, size = 0x4, scoped, tag = 'scoped memory for tpu_custom_call.1']
    #allocation11 [shape = 'u8[4096]{0}', space=vmem, size = 0x1000, scoped, tag = 'output window, operand 2, single buffered']
    %11 = vsyncpa [#allocation4], 0
    %12 = vsyncpa [#allocation7], 0
    %13 = vsyncpa [#allocation5], 0
    %14 = vsyncpa [#allocation10], 0
    // Predicated region
    $region2: #{tpu_custom_call.1} parent=1 // pred_check
      _
    $region3: #{tpu_custom_call.1} parent=1 // pred_check_branch
      %16 = sbr.rel (0) target = $region5
    $region4: #{tpu_custom_call.1} parent=1 // pred_region
      %s18 = ssub.s32 256, 256
      %19 = vsyncadd [#allocation4], %s18
      %s20 = sshll.u32 [#allocation3], 4
      %s21 = int_to_ptr.vmem [resolvable:$true] %s20
      %26 = dma.hbm_to_vmem [thread:$0]  %s0, 256, %s21, [#allocation4], 128, 128, 8
    $region5: #{tpu_custom_call.1} parent=1 // pred_fallthru
      _
    // Predicated region
    $region6: #{tpu_custom_call.1} parent=1 // pred_check
      _
    $region7: #{tpu_custom_call.1} parent=1 // pred_check_branch
      %28 = sbr.rel (0) target = $region9
    $region8: #{tpu_custom_call.1} parent=1 // pred_region
      %s30 = ssub.s32 256, 256
      %31 = vsyncadd [#allocation7], %s30
      %s32 = sshll.u32 [#allocation6], 4
      %s33 = int_to_ptr.vmem [resolvable:$true] %s32
      %38 = dma.hbm_to_vmem [thread:$0]  %s1, 256, %s33, [#allocation7], 64, 64, 4
    $region9: #{tpu_custom_call.1} parent=1 // pred_fallthru
      _
    // Predicated region
    $region10: #{tpu_custom_call.1} parent=1 // pred_check
      _
    $region11: #{tpu_custom_call.1} parent=1 // pred_check_branch
      %40 = sbr.rel (0) target = $region13
    $region12: #{tpu_custom_call.1} parent=1 // pred_region
      _
    $region13: #{tpu_custom_call.1} parent=1 // pred_fallthru
      _
    // Predicated region
    $region14: #{tpu_custom_call.1} parent=1 // pred_check
      _
    $region15: #{tpu_custom_call.1} parent=1 // pred_check_branch
      %42 = sbr.rel (0) target = $region17
    $region16: #{tpu_custom_call.1} parent=1 // pred_region
      %43 = dma.done [#allocation4], 256
    $region17: #{tpu_custom_call.1} parent=1 // pred_fallthru
      _
    // Predicated region
    $region18: #{tpu_custom_call.1} parent=1 // pred_check
      _
    $region19: #{tpu_custom_call.1} parent=1 // pred_check_branch
      %45 = sbr.rel (0) target = $region21
    $region20: #{tpu_custom_call.1} parent=1 // pred_region
      %46 = dma.done [#allocation7], 256
    $region21: #{tpu_custom_call.1} parent=1 // pred_fallthru
      _
    %p48 = scmp.eq.s32.totalorder 0, 0
    // Predicated region
    $region22: #{tpu_custom_call.1} parent=1 // pred_check
      %p49 = pneg %p48
    $region23: #{tpu_custom_call.1} parent=1 // pred_check_branch
      %51 = sbr.rel (%p49) target = $region25
    $region24: #{tpu_custom_call.1} parent=1 // pred_region
      %vm52 = vcmask 785408
      %53 = vst.msk [vmem:[#allocation2] sm:$0xff] %vm52, 0.0
      %54 = vst.msk [vmem:[#allocation2 + $0x8] sm:$0xff] %vm52, 0.0
    $region25: #{tpu_custom_call.1} parent=1 // pred_fallthru
      _
    %v55 = vld [vmem:[#allocation2] sm:$0xff]
    %v56 = vld [vmem:[#allocation2 + $0x8] sm:$0xff]
    %v57 = vld [vmem:[#allocation3] sm:$0xff]
    %v58 = vld [vmem:[#allocation3 + $0x8] sm:$0xff]
    %v59 = vpack.c.bf16 %v58, %v57
    %v60 = vld [vmem:[#allocation6] sm:$0xf]
    %v61 = vld [vmem:[#allocation6 + $0x4] sm:$0xf]
    %v62 = vld [vmem:[#allocation6 + $0x8] sm:$0xf]
    %v63 = vld [vmem:[#allocation6 + $0xc] sm:$0xf]
    %v68 = vunpack.c.l.b16 %v60
    %v69 = vunpack.c.l.b16 %v61
    %v70 = vunpack.c.l.b16 %v62
    %v71 = vunpack.c.l.b16 %v63
    %v72 = vpack.c.b16 %v69, %v68
    %v73 = vpack.c.b16 %v71, %v70
    %vm76 = vcmask 261120
    %v78 = vsel %vm76, %v59, 0
    %80 = vmatprep.subr.bf16.mxu0 0
    %81 = vmatpush1.bf16.msra.mxu0 %v72
    %82 = vmatprep.subr.bf16.mxu0 0
    %83 = vmatpush1.bf16.msra.mxu0 %v73
    %84 = vmatprep.subr.bf16.mxu0 0
    %85 = vmatpush1.bf16.msra.mxu0 0
    %86 = vmatprep.subr.bf16.mxu0 0
    %87 = vmatpush1.bf16.msra.mxu0 0
    %88 = vmatprep.subr.bf16.mxu0 0
    %89 = vmatpush1.bf16.msra.mxu0 0
    %90 = vmatprep.subr.bf16.mxu0 0
    %91 = vmatpush1.bf16.msra.mxu0 0
    %92 = vmatprep.subr.bf16.mxu0 0
    %93 = vmatpush1.bf16.msra.mxu0 0
    %94 = vmatprep.subr.bf16.mxu0 0
    %95 = vmatpush1.bf16.msra.mxu0 0
    %96 = vmatprep.subr.bf16.mxu0 0
    %97 = vmatpush1.bf16.msra.mxu0 0
    %98 = vmatprep.subr.bf16.mxu0 0
    %99 = vmatpush1.bf16.msra.mxu0 0
    %100 = vmatprep.subr.bf16.mxu0 0
    %101 = vmatpush1.bf16.msra.mxu0 0
    %102 = vmatprep.subr.bf16.mxu0 0
    %103 = vmatpush1.bf16.msra.mxu0 0
    %104 = vmatprep.subr.bf16.mxu0 0
    %105 = vmatpush1.bf16.msra.mxu0 0
    %106 = vmatprep.subr.bf16.mxu0 0
    %107 = vmatpush1.bf16.msra.mxu0 0
    %108 = vmatprep.subr.bf16.mxu0 0
    %109 = vmatpush1.bf16.msra.mxu0 0
    %110 = vmatprep.subr.bf16.mxu0 0
    %111 = vmatpush1.bf16.msra.mxu0 0
    %112 = vmatprep.mubr.bf16.mxu0 0
    %113 = vmatmul.mubr.bf16.gmra.mrb[0].mxu0 %v78
    %v114 = vpop.f32.mrb[0].mxu0
    %v115 = vadd.f32 0.0, %v114
    %v116 = vpop.f32.mrb[0].mxu0
    %v117 = vpop.f32.mrb[0].mxu0
    %v118 = vadd.f32 0.0, %v117
    %v119 = vpop.f32.mrb[0].mxu0
    %120 = vdwg.mxu0
    %v121 = vadd.f32 %v55, %v115
    %v122 = vadd.f32 %v56, %v118
    %vm123 = vcmask 785408
    %124 = vst.msk [vmem:[#allocation2] sm:$0xff] %vm123, %v121
    %125 = vst.msk [vmem:[#allocation2 + $0x8] sm:$0xff] %vm123, %v122
    // Predicated region
    $region26: #{tpu_custom_call.1} parent=1 // pred_check
      %p126 = pneg %p48
    $region27: #{tpu_custom_call.1} parent=1 // pred_check_branch
      %128 = sbr.rel (%p126) target = $region29
    $region28: #{tpu_custom_call.1} parent=1 // pred_region
      %v129 = vld [vmem:[#allocation2] sm:$0xff]
      %v130 = vld [vmem:[#allocation2 + $0x8] sm:$0xff]
      %v131 = vld [vmem:[%s2] sm:$0x1]
      %v133 = vlaneseq
      %v134 = vshrl.u32 %v133, 7
      %v135 = vsub.s32 0, %v134
      %v136 = vrot.slane %v131, %v135
      %v138 = vadd.f32 %v129, %v136
      %v139 = vadd.f32 %v130, %v136
      %v140 = vpack.c.bf16 %v139, %v138
      %v142 = vunpack.c.l.b16 %v140
      %v143 = vunpack.c.h.b16 %v140
      %v144 = vpack.c.b16 %v142, %v142
      %v145 = vpack.c.b16 %v143, %v143
      %vm148 = vcmask 257024
      %149 = vst.msk [vmem:[#allocation8] sm:$0xf] %vm148, %v144
      %150 = vst.msk [vmem:[#allocation8 + $0x4] sm:$0xf] %vm148, %v145
      %151 = vrot.lane.b32.xlu0 %v144, 96
      %v152 = vpop.permute.xlu0 %151
      %153 = vrot.lane.b32.xlu0 %v145, 96
      %v154 = vpop.permute.xlu0 %153
      %157 = vst.msk [vmem:[#allocation9] sm:$0xf] %vm148, %v152
      %158 = vst.msk [vmem:[#allocation9 + $0x4] sm:$0xf] %vm148, %v154
      %159 = vrot.lane.b32.xlu0 %v144, 64
      %v160 = vpop.permute.xlu0 %159
      %161 = vrot.lane.b32.xlu0 %v145, 64
      %v162 = vpop.permute.xlu0 %161
      %165 = vst.msk [vmem:[#allocation11] sm:$0xf] %vm148, %v160
      %166 = vst.msk [vmem:[#allocation11 + $0x4] sm:$0xf] %vm148, %v162
    $region29: #{tpu_custom_call.1} parent=1 // pred_fallthru
      _
    // Predicated region
    $region30: #{tpu_custom_call.1} parent=1 // pred_check
      _
    $region31: #{tpu_custom_call.1} parent=1 // pred_check_branch
      %168 = sbr.rel (0) target = $region33
    $region32: #{tpu_custom_call.1} parent=1 // pred_region
      %s170 = ssub.s32 128, 128
      %171 = vsyncadd [#allocation5], %s170
      %s172 = sshll.u32 [#allocation8], 4
      %s173 = int_to_ptr.vmem [resolvable:$true] %s172
      %178 = dma.vmem_to_hbm [thread:$0]  %s173, 128, %s3, [#allocation5], 64, 64, 4
    $region33: #{tpu_custom_call.1} parent=1 // pred_fallthru
      _
    // Predicated region
    $region34: #{tpu_custom_call.1} parent=1 // pred_check
      _
    $region35: #{tpu_custom_call.1} parent=1 // pred_check_branch
      %180 = sbr.rel (0) target = $region37
    $region36: #{tpu_custom_call.1} parent=1 // pred_region
      %s182 = ssub.s32 128, 128
      %183 = vsyncadd [#allocation10], %s182
      %s184 = sshll.u32 [#allocation9], 4
      %s185 = int_to_ptr.vmem [resolvable:$true] %s184
      %190 = dma.vmem_to_hbm [thread:$0]  %s185, 128, %s4, [#allocation10], 64, 64, 4
    $region37: #{tpu_custom_call.1} parent=1 // pred_fallthru
      _
    // Predicated region
    $region38: #{tpu_custom_call.1} parent=1 // pred_check
      _
    $region39: #{tpu_custom_call.1} parent=1 // pred_check_branch
      %192 = sbr.rel (0) target = $region41
    $region40: #{tpu_custom_call.1} parent=1 // pred_region
      %s194 = ssub.s32 128, 128
      %195 = vsyncadd [#allocation10], %s194
      %s196 = sshll.u32 [#allocation11], 4
      %s197 = int_to_ptr.vmem [resolvable:$true] %s196
      %202 = dma.vmem_to_hbm [thread:$0]  %s197, 128, %s5, [#allocation10], 64, 64, 4
    $region41: #{tpu_custom_call.1} parent=1 // pred_fallthru
      _
    // Predicated region
    $region42: #{tpu_custom_call.1} parent=1 // pred_check
      _
    $region43: #{tpu_custom_call.1} parent=1 // pred_check_branch
      %204 = sbr.rel (0) target = $region45
    $region44: #{tpu_custom_call.1} parent=1 // pred_region
      %205 = dma.done [#allocation5], 128
    $region45: #{tpu_custom_call.1} parent=1 // pred_fallthru
      _
    // Predicated region
    $region46: #{tpu_custom_call.1} parent=1 // pred_check
      _
    $region47: #{tpu_custom_call.1} parent=1 // pred_check_branch
      %207 = sbr.rel (0) target = $region49
    $region48: #{tpu_custom_call.1} parent=1 // pred_region
      %208 = dma.done [#allocation10], 128
    $region49: #{tpu_custom_call.1} parent=1 // pred_fallthru
      _
    // Predicated region
    $region50: #{tpu_custom_call.1} parent=1 // pred_check
      _
    $region51: #{tpu_custom_call.1} parent=1 // pred_check_branch
      %210 = sbr.rel (0) target = $region53
    $region52: #{tpu_custom_call.1} parent=1 // pred_region
      %211 = dma.done [#allocation10], 128
    $region53: #{tpu_custom_call.1} parent=1 // pred_fallthru
      _
    %212 = vsyncpa [#allocation4], 1
    %213 = vsyncpa [#allocation7], 1
    %214 = vsyncpa [#allocation5], 1
    %215 = vsyncpa [#allocation10], 1

</llo_original>
